<compile_context>
chip_gen: v7x
topology: tpu7x:2x2x1
jax: 0.10.0
libtpu: 0.0.40
codegen_flags: <defaults>
</compile_context>

<pallas_src>
import math

import jax
import jax.numpy as jnp
from jax.experimental import pallas as pl
from jax.experimental.pallas import tpu as pltpu


LANE = 128       # lane width: batch tiles are lane-dense multiples of this
SUBLANE = 8      # f32 sublane packing: D tiles are multiples of this

# (2 inputs + 2 outputs) x 2 double-buffers = 8 live (td x tb) tiles.
_TILE_BUDGET_BYTES = 16 << 20     # live-buffer budget (fits every generation)
_VMEM_LIMIT_BYTES = 32 << 20      # requested scoped-VMEM limit (headroom incl. vecs)


# ------------------------- Pallas kernels (hot path) -------------------------

def _box_decoder_kernel(emb_ref, off_ref, relvec_ref, offvec_ref,
                        out_emb_ref, out_off_ref):
    emb = emb_ref[...]                                    # [td, tb]
    # embeddings += embeddings + rel_vec (rel_vec broadcast over batch lanes)
    out_emb_ref[...] = (emb + emb + relvec_ref[...]).astype(out_emb_ref.dtype)
    # offset_embeddings += sigmoid(off_vec); tiny EUP op per tile, free under DMA.
    out_off_ref[...] = (off_ref[...] + jax.nn.sigmoid(offvec_ref[...])
                        ).astype(out_off_ref.dtype)


def _box_decoder_multi_kernel(emb_ref, off_ref, relvecs_ref, offvecs_ref,
                              out_emb_ref, out_off_ref):
    emb = emb_ref[...]                                    # [td, tb]
    rel = relvecs_ref[...]                                # [1, td, 1]
    # (td, tb) op (1, td, 1) broadcasts to (1, td, tb) == output block shape.
    out_emb_ref[...] = (emb + emb + rel).astype(out_emb_ref.dtype)
    out_off_ref[...] = (off_ref[...] + jax.nn.sigmoid(offvecs_ref[...])
                        ).astype(out_off_ref.dtype)


# ------------------------------- tile sizing --------------------------------

def _pick_tiles(D, B, itemsize):
    """Pick (td, tb): D tile (sublane axis) and lane-dense batch tile (lane axis)."""
    def lane_cap(td):
        cap = _TILE_BUDGET_BYTES // (8 * td * itemsize)
        return max(LANE, (cap // LANE) * LANE)

    td = D
    tb = lane_cap(td)
    # Large-D guard (v7x has only 64 MiB VMEM): tile D if even a 128-lane
    # batch tile would blow the live-buffer budget.
    if tb == LANE and 8 * D * LANE * itemsize > _TILE_BUDGET_BYTES:
        td = max(SUBLANE,
                 (_TILE_BUDGET_BYTES // (8 * LANE * itemsize)) // SUBLANE * SUBLANE)
        tb = LANE

    # Never wider than the lane-rounded batch.
    tb = min(tb, LANE * pl.cdiv(B, LANE))
    # Keep >= 2 batch-grid steps so "parallel" sharding engages both v7x TCs.
    if B >= 2 * LANE:
        tb = min(tb, max(LANE, (B // 2) // LANE * LANE))
    # Full-extent blocks are legal even when the extent is not a lane/sublane
    # multiple; they avoid any ragged-tile masking for small arrays.
    if tb >= B:
        tb = B
    if td >= D:
        td = D
    return td, tb


# ------------------------------ single relation ------------------------------

def box_decoder_forward(embeddings, offset_embeddings, feat_mat, pos_mat, off_emb,
                        *, donate_inputs=False):
    """embeddings/offset_embeddings: [D, B]; feat_mat: [1, Df]; pos_mat: [1, Ds];
    off_emb: [1, D] with D = Df + Ds.  Returns (new_embeddings, new_offsets).

    donate_inputs=True aliases the outputs onto the caller's HBM buffers
    (in-place "+=" semantics).  Only use it when the caller does not reuse the
    input arrays afterwards (donation invalidates them)."""
    D, B = embeddings.shape
    emb_dtype = embeddings.dtype
    off_dtype = offset_embeddings.dtype

    # Glue (pure reshape/concat, no compute): per-relation column vectors.
    rel_vec = jnp.concatenate([feat_mat, pos_mat], axis=1).reshape(D, 1).astype(emb_dtype)
    off_vec = off_emb.reshape(D, 1).astype(off_dtype)

    itemsize = max(jnp.dtype(emb_dtype).itemsize, jnp.dtype(off_dtype).itemsize)
    td, tb = _pick_tiles(D, B, itemsize)
    grid = (pl.cdiv(D, td), pl.cdiv(B, tb))

    tile_spec = pl.BlockSpec((td, tb), lambda d, b: (d, b))
    vec_spec = pl.BlockSpec((td, 1), lambda d, b: (d, 0))   # tiny, VMEM-resident

    aliases = {0: 0, 1: 1} if donate_inputs else {}

    out_emb, out_off = pl.pallas_call(
        _box_decoder_kernel,
        grid=grid,
        in_specs=[tile_spec, tile_spec, vec_spec, vec_spec],
        out_specs=(tile_spec, tile_spec),
        out_shape=(
            jax.ShapeDtypeStruct((D, B), emb_dtype),
            jax.ShapeDtypeStruct((D, B), off_dtype),
        ),
        input_output_aliases=aliases,
        compiler_params=pltpu.CompilerParams(
            dimension_semantics=("parallel", "parallel"),
            vmem_limit_bytes=_VMEM_LIMIT_BYTES),
    )(embeddings, offset_embeddings, rel_vec, off_vec)
    return out_emb, out_off


# ------------------------ batched over R relations ---------------------------

def box_decoder_forward_multi(embeddings, offset_embeddings, rel_vecs, off_vecs):
    """Apply R relation updates to the same batch in ONE pallas_call.

    embeddings/offset_embeddings: [D, B]; rel_vecs/off_vecs: [R, D].
    Returns (out_emb [R, D, B], out_off [R, D, B]).  Grid order is
    (d, b, r) so each embeddings tile stays VMEM-resident across the R
    inner steps (read once, written R times — the unavoidable minimum)."""
    D, B = embeddings.shape
    R = rel_vecs.shape[0]
    emb_dtype = embeddings.dtype
    off_dtype = offset_embeddings.dtype

    rel3 = rel_vecs.reshape(R, D, 1).astype(emb_dtype)
    off3 = off_vecs.reshape(R, D, 1).astype(off_dtype)

    itemsize = max(jnp.dtype(emb_dtype).itemsize, jnp.dtype(off_dtype).itemsize)
    td, tb = _pick_tiles(D, B, itemsize)
    grid = (pl.cdiv(D, td), pl.cdiv(B, tb), R)

    in_tile = pl.BlockSpec((td, tb), lambda d, b, r: (d, b))
    vec_tile = pl.BlockSpec((1, td, 1), lambda d, b, r: (r, d, 0))
    out_tile = pl.BlockSpec((1, td, tb), lambda d, b, r: (r, d, b))

    out_emb, out_off = pl.pallas_call(
        _box_decoder_multi_kernel,
        grid=grid,
        in_specs=[in_tile, in_tile, vec_tile, vec_tile],
        out_specs=(out_tile, out_tile),
        out_shape=(
            jax.ShapeDtypeStruct((R, D, B), emb_dtype),
            jax.ShapeDtypeStruct((R, D, B), off_dtype),
        ),
        compiler_params=pltpu.CompilerParams(
            dimension_semantics=("parallel", "parallel", "parallel"),
            vmem_limit_bytes=_VMEM_LIMIT_BYTES),
    )(embeddings, offset_embeddings, rel3, off3)
    return out_emb, out_off


# ----------------------- deterministic parameter setup ----------------------

def xavier_uniform(key, shape):
    fan_in, fan_out = shape[0], shape[1]
    bound = math.sqrt(6.0 / (fan_in + fan_out))
    return jax.random.uniform(key, shape, jnp.float32, -bound, bound)


class BoxDecoderParams:
    def __init__(self, relations, feat_embed_dim, spa_embed_dim, key):
        self.feat_embed_dim = feat_embed_dim
        self.spa_embed_dim = spa_embed_dim
        self.rels = []
        self.feat_mats = {}
        self.pos_mats = {}
        self.rel_offset_embeddings = {}
        for r1 in relations:
            for r2 in relations[r1]:
                rel = (r1, r2[1], r2[0])
                self.rels.append(rel)
                key, k1, k2, k3 = jax.random.split(key, 4)
                self.feat_mats[rel] = xavier_uniform(k1, (1, feat_embed_dim))
                self.pos_mats[rel] = xavier_uniform(k2, (1, spa_embed_dim))
                self.rel_offset_embeddings[rel] = xavier_uniform(
                    k3, (1, feat_embed_dim + spa_embed_dim))
        # Stacked [R, D] relation vectors for the batched (single-dispatch) path.
        self.rel_vecs = jnp.stack(
            [jnp.concatenate([self.feat_mats[r], self.pos_mats[r]], axis=1)[0]
             for r in self.rels], axis=0)
        self.off_vecs = jnp.stack(
            [self.rel_offset_embeddings[r][0] for r in self.rels], axis=0)

    def forward(self, embeddings, offset_embeddings, rel, *, donate_inputs=False):
        return box_decoder_forward(
            embeddings, offset_embeddings,
            self.feat_mats[rel], self.pos_mats[rel],
            self.rel_offset_embeddings[rel],
            donate_inputs=donate_inputs)

    def forward_all(self, embeddings, offset_embeddings):
        """All relations in one pallas_call; returns (rel list, [R,D,B], [R,D,B])."""
        out_emb, out_off = box_decoder_forward_multi(
            embeddings, offset_embeddings, self.rel_vecs, self.off_vecs)
        return self.rels, out_emb, out_off


# --------------------------------- demo run ---------------------------------

if __name__ == "__main__":
    feat_embed_dim = 16
    spa_embed_dim = 16
    embed_dim = feat_embed_dim + spa_embed_dim   # 32
    batch = 8

    relations = {
        "place": [("person", "livesIn"), ("company", "locatedAt")],
        "person": [("company", "worksFor")],
    }

    key = jax.random.PRNGKey(0)
    kparams, kemb, koff = jax.random.split(key, 3)

    params = BoxDecoderParams(relations, feat_embed_dim, spa_embed_dim, kparams)

    embeddings = jax.random.normal(kemb, (embed_dim, batch), jnp.float32)
    offset_embeddings = jax.random.normal(koff, (embed_dim, batch), jnp.float32)

    # ---- single-relation path (inputs reused below, so no donation) ----
    rel = ("place", "livesIn", "person")
    out_emb, out_off = params.forward(embeddings, offset_embeddings, rel)
    out_emb, out_off = jax.block_until_ready((out_emb, out_off))

    rel_vec = jnp.concatenate([params.feat_mats[rel], params.pos_mats[rel]],
                              axis=1).reshape(embed_dim, 1)
    ref_emb = embeddings + (embeddings + rel_vec)
    ref_off = offset_embeddings + jax.nn.sigmoid(
        params.rel_offset_embeddings[rel]).reshape(embed_dim, 1)
    assert out_emb.shape == (embed_dim, batch)
    assert out_off.shape == (embed_dim, batch)
    assert jnp.allclose(out_emb, ref_emb, atol=1e-6)
    assert jnp.allclose(out_off, ref_off, atol=1e-6)

    # ---- batched all-relations path (one dispatch for every relation) ----
    rels, m_emb, m_off = params.forward_all(embeddings, offset_embeddings)
    m_emb, m_off = jax.block_until_ready((m_emb, m_off))
    assert m_emb.shape == (len(rels), embed_dim, batch)
    for i, r in enumerate(rels):
        rv = jnp.concatenate([params.feat_mats[r], params.pos_mats[r]],
                             axis=1).reshape(embed_dim, 1)
        ov = jax.nn.sigmoid(params.rel_offset_embeddings[r]).reshape(embed_dim, 1)
        assert jnp.allclose(m_emb[i], embeddings + (embeddings + rv), atol=1e-6)
        assert jnp.allclose(m_off[i], offset_embeddings + ov, atol=1e-6)

    print("KERNEL_OK")
</pallas_src>

<mosaic_0001>
module attributes {stable_mosaic.version = 11 : i64} {
  func.func @_box_decoder_kernel(%arg0: i32, %arg1: i32, %arg2: memref<32x8xf32, #tpu.memory_space<vmem>>, %arg3: memref<32x8xf32, #tpu.memory_space<vmem>>, %arg4: memref<32x1xf32, #tpu.memory_space<vmem>>, %arg5: memref<32x1xf32, #tpu.memory_space<vmem>>, %arg6: memref<32x8xf32, #tpu.memory_space<vmem>>, %arg7: memref<32x8xf32, #tpu.memory_space<vmem>>) attributes {dimension_semantics = [#tpu.dimension_semantics<parallel>, #tpu.dimension_semantics<parallel>], iteration_bounds = array<i64: 1, 1>, scalar_prefetch = 0 : i64, scratch_operands = 0 : i64, tpu.core_type = #tpu.core_type<tc>, window_params = [{transform_indices = @transform_0, window_bounds = array<i64: 32, 8>}, {transform_indices = @transform_1, window_bounds = array<i64: 32, 8>}, {transform_indices = @transform_2, window_bounds = array<i64: 32, 1>}, {transform_indices = @transform_3, window_bounds = array<i64: 32, 1>}, {transform_indices = @transform_4, window_bounds = array<i64: 32, 8>}, {transform_indices = @transform_5, window_bounds = array<i64: 32, 8>}]} {
    %c0 = arith.constant 0 : index
    %c0_0 = arith.constant 0 : index
    %0 = vector.load %arg2[%c0, %c0_0] : memref<32x8xf32, #tpu.memory_space<vmem>>, vector<32x8xf32>
    %1 = arith.addf %0, %0 : vector<32x8xf32>
    %c0_1 = arith.constant 0 : index
    %c0_2 = arith.constant 0 : index
    %2 = vector.load %arg4[%c0_1, %c0_2] : memref<32x1xf32, #tpu.memory_space<vmem>>, vector<32x1xf32>
    %3 = vector.broadcast %2 : vector<32x1xf32> to vector<32x8xf32>
    %4 = arith.addf %1, %3 : vector<32x8xf32>
    %c0_3 = arith.constant 0 : index
    %c0_4 = arith.constant 0 : index
    %5 = vector.load %arg6[%c0_3, %c0_4] : memref<32x8xf32, #tpu.memory_space<vmem>>, vector<32x8xf32>
    tpu.vector_store %arg6[%c0_3, %c0_4], %4 {strides = array<i32>} : memref<32x8xf32, #tpu.memory_space<vmem>>, vector<32x8xf32>,
    %c0_5 = arith.constant 0 : index
    %c0_6 = arith.constant 0 : index
    %6 = vector.load %arg3[%c0_5, %c0_6] : memref<32x8xf32, #tpu.memory_space<vmem>>, vector<32x8xf32>
    %c0_7 = arith.constant 0 : index
    %c0_8 = arith.constant 0 : index
    %7 = vector.load %arg5[%c0_7, %c0_8] : memref<32x1xf32, #tpu.memory_space<vmem>>, vector<32x1xf32>
    %8 = arith.negf %7 : vector<32x1xf32>
    %9 = math.exp %8 : vector<32x1xf32>
    %cst = arith.constant 1.000000e+00 : f32
    %10 = vector.broadcast %cst : f32 to vector<32x1xf32>
    %11 = arith.addf %10, %9 : vector<32x1xf32>
    %12 = arith.divf %10, %11 : vector<32x1xf32>
    %13 = vector.broadcast %12 : vector<32x1xf32> to vector<32x8xf32>
    %14 = arith.addf %6, %13 : vector<32x8xf32>
    %c0_9 = arith.constant 0 : index
    %c0_10 = arith.constant 0 : index
    %15 = vector.load %arg7[%c0_9, %c0_10] : memref<32x8xf32, #tpu.memory_space<vmem>>, vector<32x8xf32>
    tpu.vector_store %arg7[%c0_9, %c0_10], %14 {strides = array<i32>} : memref<32x8xf32, #tpu.memory_space<vmem>>, vector<32x8xf32>,
    return
  }
  func.func @transform_0(%arg0: i32, %arg1: i32) -> (i32, i32) {
    %c0_i32 = arith.constant 0 : i32
    return %arg0, %arg1 : i32, i32
  }
  func.func @transform_1(%arg0: i32, %arg1: i32) -> (i32, i32) {
    %c0_i32 = arith.constant 0 : i32
    return %arg0, %arg1 : i32, i32
  }
  func.func @transform_2(%arg0: i32, %arg1: i32) -> (i32, i32) {
    %c0_i32 = arith.constant 0 : i32
    %c0_i32_0 = arith.constant 0 : i32
    return %arg0, %c0_i32 : i32, i32
  }
  func.func @transform_3(%arg0: i32, %arg1: i32) -> (i32, i32) {
    %c0_i32 = arith.constant 0 : i32
    %c0_i32_0 = arith.constant 0 : i32
    return %arg0, %c0_i32 : i32, i32
  }
  func.func @transform_4(%arg0: i32, %arg1: i32) -> (i32, i32) {
    %c0_i32 = arith.constant 0 : i32
    return %arg0, %arg1 : i32, i32
  }
  func.func @transform_5(%arg0: i32, %arg1: i32) -> (i32, i32) {
    %c0_i32 = arith.constant 0 : i32
    return %arg0, %arg1 : i32, i32
  }
}

</mosaic_0001>

<llo_original>
// kernel: tpu_custom_call.1
$region0: #{tpu_custom_call.1}
  #allocation0 [shape = 'u32[]', space=smem, size = 0x4, offset = 0x4, fixed_abs, tag = 'smem constant byte address 0x4 - core index']
  #allocation1 [shape = 'u32[144,128]{1,0:T(1,128)}', space=vmem, size = 0x12000, scoped, tag = 'internal scratch']
  %s0 = inlined_call_operand.vmem [shape: f32[32,8], index: 0, kind: input, shape index: {}]
  %s1 = inlined_call_operand.vmem [shape: f32[32,8], index: 1, kind: input, shape index: {}]
  %s2 = inlined_call_operand.vmem [shape: f32[32,1], index: 2, kind: input, shape index: {}]
  %s3 = inlined_call_operand.vmem [shape: f32[32,1], index: 3, kind: input, shape index: {}]
  %s4 = inlined_call_operand.vmem [shape: f32[32,8], index: 4, kind: output, shape index: {0}]
  %s5 = inlined_call_operand.vmem [shape: f32[32,8], index: 5, kind: output, shape index: {1}]
  %6 = xla_tuple %s4, %s5
  %s7 = sld [smem:[#allocation0]]
  $region34: #{tpu_custom_call.1} parent=0
    _
  %s9 = ssub.s32 1, %s7
  %s10 = scalar_select 0, %s9, %s7
  // Predicated region
  $region2: #{tpu_custom_call.1} parent=0 // pred_check
    _
  $region3: #{tpu_custom_call.1} parent=0 // pred_check_branch
    %12 = sbr.rel (0) target = $region5
  $region4: #{tpu_custom_call.1} parent=0 // pred_region
    _
  $region5: #{tpu_custom_call.1} parent=0 // pred_fallthru
    _
  // Predicated region
  $region6: #{tpu_custom_call.1} parent=0 // pred_check
    _
  $region7: #{tpu_custom_call.1} parent=0 // pred_check_branch
    %14 = sbr.rel (0) target = $region9
  $region8: #{tpu_custom_call.1} parent=0 // pred_region
    _
  $region9: #{tpu_custom_call.1} parent=0 // pred_fallthru
    _
  // Predicated region
  $region10: #{tpu_custom_call.1} parent=0 // pred_check
    _
  $region11: #{tpu_custom_call.1} parent=0 // pred_check_branch
    %16 = sbr.rel (0) target = $region13
  $region12: #{tpu_custom_call.1} parent=0 // pred_region
    _
  $region13: #{tpu_custom_call.1} parent=0 // pred_fallthru
    _
  // Predicated region
  $region14: #{tpu_custom_call.1} parent=0 // pred_check
    _
  $region15: #{tpu_custom_call.1} parent=0 // pred_check_branch
    %18 = sbr.rel (0) target = $region17
  $region16: #{tpu_custom_call.1} parent=0 // pred_region
    _
  $region17: #{tpu_custom_call.1} parent=0 // pred_fallthru
    _
  %v19 = vld [vmem:[%s0] sm:$0xff]
  %v20 = vld [vmem:[%s0 + $0x8] sm:$0xff]
  %v21 = vld [vmem:[%s0 + $0x10] sm:$0xff]
  %v22 = vld [vmem:[%s0 + $0x18] sm:$0xff]
  %v23 = vadd.f32 %v19, %v19
  %v24 = vadd.f32 %v20, %v20
  %v25 = vadd.f32 %v21, %v21
  %v26 = vadd.f32 %v22, %v22
  %v27 = vld [vmem:[%s2] sm:$0xff]
  %v28 = vld [vmem:[%s2 + $0x8] sm:$0xff]
  %v29 = vld [vmem:[%s2 + $0x10] sm:$0xff]
  %v30 = vld [vmem:[%s2 + $0x18] sm:$0xff]
  %32 = vset.pattern.permute.xlu0 0
  %33 = vperm.xlu0 %32, %v27
  %v34 = vpop.permute.xlu0 %33
  %37 = vset.pattern.permute.xlu0 0
  %38 = vperm.xlu0 %37, %v28
  %v39 = vpop.permute.xlu0 %38
  %42 = vset.pattern.permute.xlu0 0
  %43 = vperm.xlu0 %42, %v29
  %v44 = vpop.permute.xlu0 %43
  %47 = vset.pattern.permute.xlu0 0
  %48 = vperm.xlu0 %47, %v30
  %v49 = vpop.permute.xlu0 %48
  %v51 = vadd.f32 %v23, %v34
  %v52 = vadd.f32 %v24, %v39
  %v53 = vadd.f32 %v25, %v44
  %v54 = vadd.f32 %v26, %v49
  %vm55 = vcmask 64512
  %56 = vst.msk [vmem:[%s4] sm:$0xff] %vm55, %v51
  %57 = vst.msk [vmem:[%s4 + $0x8] sm:$0xff] %vm55, %v52
  %58 = vst.msk [vmem:[%s4 + $0x10] sm:$0xff] %vm55, %v53
  %59 = vst.msk [vmem:[%s4 + $0x18] sm:$0xff] %vm55, %v54
  %v60 = vld [vmem:[%s1] sm:$0xff]
  %v61 = vld [vmem:[%s1 + $0x8] sm:$0xff]
  %v62 = vld [vmem:[%s1 + $0x10] sm:$0xff]
  %v63 = vld [vmem:[%s1 + $0x18] sm:$0xff]
  %v64 = vld [vmem:[%s3] sm:$0xff]
  %v65 = vld [vmem:[%s3 + $0x8] sm:$0xff]
  %v66 = vld [vmem:[%s3 + $0x10] sm:$0xff]
  %v67 = vld [vmem:[%s3 + $0x18] sm:$0xff]
  %v68 = vxor.u32 %v64, 2147483648
  %v69 = vxor.u32 %v65, 2147483648
  %v70 = vxor.u32 %v66, 2147483648
  %v71 = vxor.u32 %v67, 2147483648
  %v72 = vmul.f32 %v68, 1.442695
  %v73 = vpow.pop %v72
  %v74 = vmul.f32 %v69, 1.442695
  %v75 = vpow.pop %v74
  %v76 = vmul.f32 %v70, 1.442695
  %v77 = vpow.pop %v76
  %v78 = vmul.f32 %v71, 1.442695
  %v79 = vpow.pop %v78
  %v80 = vadd.f32 %v73, 1.0
  %v81 = vadd.f32 %v75, 1.0
  %v82 = vadd.f32 %v77, 1.0
  %v83 = vadd.f32 %v79, 1.0
  %v84 = vrcp.pop %v80
  %v85 = vmul.f32 1.0, %v84
  %v86 = vrcp.pop %v81
  %v87 = vmul.f32 1.0, %v86
  %v88 = vrcp.pop %v82
  %v89 = vmul.f32 1.0, %v88
  %v90 = vrcp.pop %v83
  %v91 = vmul.f32 1.0, %v90
  %93 = vset.pattern.permute.xlu0 0
  %94 = vperm.xlu0 %93, %v85
  %v95 = vpop.permute.xlu0 %94
  %98 = vset.pattern.permute.xlu0 0
  %99 = vperm.xlu0 %98, %v87
  %v100 = vpop.permute.xlu0 %99
  %103 = vset.pattern.permute.xlu0 0
  %104 = vperm.xlu0 %103, %v89
  %v105 = vpop.permute.xlu0 %104
  %108 = vset.pattern.permute.xlu0 0
  %109 = vperm.xlu0 %108, %v91
  %v110 = vpop.permute.xlu0 %109
  %v112 = vadd.f32 %v60, %v95
  %v113 = vadd.f32 %v61, %v100
  %v114 = vadd.f32 %v62, %v105
  %v115 = vadd.f32 %v63, %v110
  %116 = vst.msk [vmem:[%s5] sm:$0xff] %vm55, %v112
  %117 = vst.msk [vmem:[%s5 + $0x8] sm:$0xff] %vm55, %v113
  %118 = vst.msk [vmem:[%s5 + $0x10] sm:$0xff] %vm55, %v114
  %119 = vst.msk [vmem:[%s5 + $0x18] sm:$0xff] %vm55, %v115
  // Predicated region
  $region18: #{tpu_custom_call.1} parent=0 // pred_check
    _
  $region19: #{tpu_custom_call.1} parent=0 // pred_check_branch
    %121 = sbr.rel (0) target = $region21
  $region20: #{tpu_custom_call.1} parent=0 // pred_region
    _
  $region21: #{tpu_custom_call.1} parent=0 // pred_fallthru
    _
  // Predicated region
  $region22: #{tpu_custom_call.1} parent=0 // pred_check
    _
  $region23: #{tpu_custom_call.1} parent=0 // pred_check_branch
    %123 = sbr.rel (0) target = $region25
  $region24: #{tpu_custom_call.1} parent=0 // pred_region
    _
  $region25: #{tpu_custom_call.1} parent=0 // pred_fallthru
    _
  // Predicated region
  $region26: #{tpu_custom_call.1} parent=0 // pred_check
    _
  $region27: #{tpu_custom_call.1} parent=0 // pred_check_branch
    %125 = sbr.rel (0) target = $region29
  $region28: #{tpu_custom_call.1} parent=0 // pred_region
    _
  $region29: #{tpu_custom_call.1} parent=0 // pred_fallthru
    _
  // Predicated region
  $region30: #{tpu_custom_call.1} parent=0 // pred_check
    _
  $region31: #{tpu_custom_call.1} parent=0 // pred_check_branch
    %127 = sbr.rel (0) target = $region33
  $region32: #{tpu_custom_call.1} parent=0 // pred_region
    _
  $region33: #{tpu_custom_call.1} parent=0 // pred_fallthru
    _

</llo_original>
